<compile_context>
chip_gen: v6e
topology: v6e:2x2x1
jax: 0.10.0
libtpu: 0.0.40
codegen_flags: <defaults>
</compile_context>

<pallas_src>
import jax
import jax.numpy as jnp
from jax.experimental import pallas as pl
from jax.experimental.pallas import tpu as pltpu


# -----------------------------------------------------------------------------
# Pallas kernel: lane-dense residual 1x1 conv  ==  O = X + W @ X + b
#   x: (C, TM)  channels in sublanes, spatial in lanes (TM multiple of 128)
#   w: (C, C)   spectral-normalized weight (resident across the grid)
#   b: (C, 1)   bias, broadcast over lanes
# -----------------------------------------------------------------------------
def conv1x1_residual_kernel(x_ref, w_ref, b_ref, o_ref):
    x = x_ref[...]                                     # (C, TM)
    w = w_ref[...]                                     # (C, C)
    b = b_ref[...]                                     # (C, 1)
    y = jnp.dot(w, x, preferred_element_type=jnp.float32)   # (C, TM) on MXU
    o_ref[...] = x + y + b                             # VPU, full-width stores


def _choose_tile_m(M, max_tile):
    """Lane-dense tile along M: multiple of 128, <= max_tile, and (when
    possible) giving >= 2 grid blocks so v7x megacore can shard the grid."""
    if M <= 128:
        return M
    tm = min(max_tile, M)
    if tm == M and M >= 256:
        tm = -(-M // 2)                                # ceil(M/2) -> >= 2 blocks
    tm = max(128, (tm // 128) * 128)                   # round to lane multiple
    return tm


def conv1x1_residual(x_cm, w_sn, bias, *, max_tile_m=4096):
    """x_cm: (C, M) f32 lane-dense activations. Returns X + W_sn @ X + b."""
    C, M = x_cm.shape
    tm = _choose_tile_m(M, max_tile_m)
    grid_m = pl.cdiv(M, tm)
    M_pad = grid_m * tm
    if M_pad != M:                                     # ragged tail -> zero-pad
        x_cm = jnp.pad(x_cm, ((0, 0), (0, M_pad - M)))

    b2 = bias.reshape(C, 1)

    out = pl.pallas_call(
        conv1x1_residual_kernel,
        out_shape=jax.ShapeDtypeStruct((C, M_pad), jnp.float32),
        grid_spec=pltpu.PrefetchScalarGridSpec(
            num_scalar_prefetch=0,
            grid=(grid_m,),
            in_specs=[
                pl.BlockSpec((C, tm), lambda i: (0, i)),   # X tile (lane-dense)
                pl.BlockSpec((C, C), lambda i: (0, 0)),    # W (resident)
                pl.BlockSpec((C, 1), lambda i: (0, 0)),    # bias (resident)
            ],
            out_specs=pl.BlockSpec((C, tm), lambda i: (0, i)),
        ),
        compiler_params=pltpu.CompilerParams(
            dimension_semantics=("parallel",)),
    )(x_cm, w_sn, b2)

    if M_pad != M:
        out = out[:, :M]
    return out


# -----------------------------------------------------------------------------
# Plain-JAX glue: fused squeeze->lane-dense flatten, and spectral norm setup
# -----------------------------------------------------------------------------
def squeeze2_to_cm(x):
    """i-ResNet squeeze (block_size=2) fused with the kernel-layout flatten.
    x: (B, C, H, W) -> (4C, B*Hh*Wh), channel order c_out = hp*2C + wp*C + c,
    spatial flattened (B, Hh, Wh)-major into the lane-dense last axis.
    Single transpose of HBM-resident data (no extra round trip)."""
    B, C, H, W = x.shape
    Hh, Wh = H // 2, W // 2
    x = x.reshape(B, C, Hh, 2, Wh, 2)                  # (B, C, Hh, hp, Wh, wp)
    x = jnp.transpose(x, (3, 5, 1, 0, 2, 4))           # (hp, wp, C, B, Hh, Wh)
    return x.reshape(4 * C, B * Hh * Wh), (B, 4 * C, Hh, Wh)


def squeeze2_nchw(x):
    """Reference-only NCHW squeeze (same channel ordering)."""
    B, C, H, W = x.shape
    x = x.reshape(B, C, H // 2, 2, W // 2, 2)
    x = jnp.transpose(x, (0, 3, 5, 1, 2, 4))           # (B, hp, wp, C, Hh, Wh)
    return x.reshape(B, 4 * C, H // 2, W // 2)


def spectral_norm_fc(weight, coeff=0.9, n_power_iterations=5, key=None):
    """weight: (Cout, Cin) (1x1 conv flattened). Returns W_sn."""
    cout, cin = weight.shape
    u = jax.random.normal(key, (cout,), dtype=jnp.float32)
    u = u / (jnp.linalg.norm(u) + 1e-12)
    v = None
    for _ in range(n_power_iterations):
        v = weight.T @ u
        v = v / (jnp.linalg.norm(v) + 1e-12)
        u = weight @ v
        u = u / (jnp.linalg.norm(u) + 1e-12)
    sigma = u @ (weight @ v)
    factor = jnp.minimum(jnp.float32(1.0), coeff / sigma)
    return weight * factor
    # TODO(synk): PyTorch SpectralNorm carries a persistent `u` across calls;
    # here power iteration restarts from a fresh random u (numerics-equivalent setup).


def conv_test_forward(x, w_sn, bias):
    """Full Conv_Test.forward: squeeze -> (x + SN(conv1x1)(x)), NCHW in/out."""
    x_cm, (B, C4, Hh, Wh) = squeeze2_to_cm(x)          # (12, M) lane-dense
    o_cm = conv1x1_residual(x_cm, w_sn, bias)          # (12, M)
    out = o_cm.reshape(C4, B, Hh, Wh)
    return jnp.transpose(out, (1, 0, 2, 3))            # single final permute -> NCHW


if __name__ == "__main__":
    key = jax.random.PRNGKey(0)
    kx, kw, kb, ku = jax.random.split(key, 4)

    # Input: (B=2, C=3, H=64, W=64) -> after squeeze -> (2, 12, 32, 32)
    # M = 2*32*32 = 2048 -> tile_m = 1024, grid = 2 (exercises tiling + megacore).
    x = jax.random.normal(kx, (2, 3, 64, 64), dtype=jnp.float32)

    # Conv2d(12, 12, kernel_size=1) parameters (deterministic, PyTorch-like scale)
    cin, cout = 12, 12
    bound = 1.0 / jnp.sqrt(jnp.float32(cin))
    w_raw = jax.random.uniform(kw, (cout, cin), jnp.float32, -bound, bound)
    bias = jax.random.uniform(kb, (cout,), jnp.float32, -bound, bound)

    # Spectral norm (coeff=0.9, 5 power iterations) applied to the weight.
    w_sn = spectral_norm_fc(w_raw, coeff=0.9, n_power_iterations=5, key=ku)

    out = conv_test_forward(x, w_sn, bias)
    out = jax.block_until_ready(out)

    # Correctness check vs. plain-JAX reference of the same math.
    xs = squeeze2_nchw(x)
    ref = xs + (jnp.einsum("oc,bchw->bohw", w_sn, xs)
                + bias.reshape(1, -1, 1, 1))
    assert out.shape == (2, 12, 32, 32)
    assert jnp.allclose(out, ref, atol=1e-5, rtol=1e-5)

    print("KERNEL_OK")
</pallas_src>

<mosaic_0001>
module attributes {stable_mosaic.version = 11 : i64} {
  func.func @conv1x1_residual_kernel(%arg0: i32, %arg1: memref<12x1024xf32, #tpu.memory_space<vmem>>, %arg2: memref<12x12xf32, #tpu.memory_space<vmem>>, %arg3: memref<12x1xf32, #tpu.memory_space<vmem>>, %arg4: memref<12x1024xf32, #tpu.memory_space<vmem>>) attributes {dimension_semantics = [#tpu.dimension_semantics<parallel>], iteration_bounds = array<i64: 2>, scalar_prefetch = 0 : i64, scratch_operands = 0 : i64, tpu.core_type = #tpu.core_type<tc>, window_params = [{transform_indices = @transform_0, window_bounds = array<i64: 12, 1024>}, {pipeline_mode = #tpu.pipeline_mode<synchronous>, transform_indices = @transform_1, window_bounds = array<i64: 12, 12>}, {pipeline_mode = #tpu.pipeline_mode<synchronous>, transform_indices = @transform_2, window_bounds = array<i64: 12, 1>}, {transform_indices = @transform_3, window_bounds = array<i64: 12, 1024>}]} {
    %c0 = arith.constant 0 : index
    %c0_0 = arith.constant 0 : index
    %0 = vector.load %arg1[%c0, %c0_0] : memref<12x1024xf32, #tpu.memory_space<vmem>>, vector<12x1024xf32>
    %c0_1 = arith.constant 0 : index
    %c0_2 = arith.constant 0 : index
    %1 = vector.load %arg2[%c0_1, %c0_2] : memref<12x12xf32, #tpu.memory_space<vmem>>, vector<12x12xf32>
    %c0_3 = arith.constant 0 : index
    %c0_4 = arith.constant 0 : index
    %2 = vector.load %arg3[%c0_3, %c0_4] : memref<12x1xf32, #tpu.memory_space<vmem>>, vector<12x1xf32>
    %cst = arith.constant dense<0.000000e+00> : vector<12x1024xf32>
    %3 = tpu.matmul %1, %0, %cst {dimension_numbers = #tpu.dot_dimension_numbers<[1], [0], [0], [1], [0, 0, 1, 1], [], []>} : vector<12x12xf32>, vector<12x1024xf32>, vector<12x1024xf32> -> vector<12x1024xf32>
    %4 = arith.addf %0, %3 : vector<12x1024xf32>
    %5 = vector.broadcast %2 : vector<12x1xf32> to vector<12x1024xf32>
    %6 = arith.addf %4, %5 : vector<12x1024xf32>
    %c0_5 = arith.constant 0 : index
    %c0_6 = arith.constant 0 : index
    %7 = vector.load %arg4[%c0_5, %c0_6] : memref<12x1024xf32, #tpu.memory_space<vmem>>, vector<12x1024xf32>
    tpu.vector_store %arg4[%c0_5, %c0_6], %6 {strides = array<i32>} : memref<12x1024xf32, #tpu.memory_space<vmem>>, vector<12x1024xf32>,
    return
  }
  func.func @transform_0(%arg0: i32) -> (i32, i32) {
    %c0_i32 = arith.constant 0 : i32
    %c0_i32_0 = arith.constant 0 : i32
    return %c0_i32, %arg0 : i32, i32
  }
  func.func @transform_1(%arg0: i32) -> (i32, i32) {
    %c0_i32 = arith.constant 0 : i32
    %c0_i32_0 = arith.constant 0 : i32
    %c0_i32_1 = arith.constant 0 : i32
    return %c0_i32, %c0_i32_0 : i32, i32
  }
  func.func @transform_2(%arg0: i32) -> (i32, i32) {
    %c0_i32 = arith.constant 0 : i32
    %c0_i32_0 = arith.constant 0 : i32
    %c0_i32_1 = arith.constant 0 : i32
    return %c0_i32, %c0_i32_0 : i32, i32
  }
  func.func @transform_3(%arg0: i32) -> (i32, i32) {
    %c0_i32 = arith.constant 0 : i32
    %c0_i32_0 = arith.constant 0 : i32
    return %c0_i32, %arg0 : i32, i32
  }
}

</mosaic_0001>

<llo_original>
// kernel: tpu_custom_call.1
$region0: #{tpu_custom_call.1}
  #allocation0 [shape = 'u32[]', space=smem, size = 0x4, offset = 0x4, fixed_abs, tag = 'smem constant byte address 0x4 - core index']
  #allocation1 [shape = 'u32[144,128]{1,0:T(1,128)}', space=vmem, size = 0x12000, scoped, tag = 'internal scratch']
  %s0 = inlined_call_operand.hbm [shape: f32[12,2048], index: 0, kind: input, shape index: {}]
  %s1 = inlined_call_operand.vmem [shape: f32[12,12], index: 1, kind: input, shape index: {}]
  %s2 = inlined_call_operand.vmem [shape: f32[12,1], index: 2, kind: input, shape index: {}]
  %s3 = inlined_call_operand.hbm [shape: f32[12,2048], index: 3, kind: output, shape index: {}]
  %s4 = sld [smem:[#allocation0]]
  $region49: #{tpu_custom_call.1} parent=0
    _
  %s6 = ssub.s32 1, %s4
  %s7 = scalar_select 0, %s6, %s4
  $region1: #{tpu_custom_call.1} parent=0
    #allocation2 [shape = 'u8[131072]{0}', space=vmem, size = 0x20000, scoped, tag = 'input window, operand 0']
    #allocation3 [shape = 's32[2]{0}', space=sflag, size = 0x8, scoped, tag = 'scoped memory for tpu_custom_call.1']
    #allocation4 [shape = 's32[2]{0}', space=sflag, size = 0x8, scoped, tag = 'scoped memory for tpu_custom_call.1']
    #allocation5 [shape = 'u8[131072]{0}', space=vmem, size = 0x20000, scoped, tag = 'output window, operand 0']
    %8 = vsyncpa [#allocation3], 0
    %s9 = scalar_lea.sflag [#allocation3], 1
    %10 = vsyncpa %s9, 0
    %11 = vsyncpa [#allocation4], 0
    %s12 = scalar_lea.sflag [#allocation4], 1
    %13 = vsyncpa %s12, 0
    loop: start=0, step=1, limit=4
    $region2: #{tpu_custom_call.1} parent=1 // loop_pre_header
      _
    $region3: #{tpu_custom_call.1} parent=1 // loop_header
      %s15 = sphi 0, %s19
      %p16 = scmp.ge.s32.totalorder %s15, 4
      %s25 = sphi 0, %s27
      %s28 = sphi 0, %s25
      %s29 = sphi 0, %s28
      %s45 = sphi 0, %s29
      %s49 = sphi 0, %s49
      %s51 = sphi 0, %s49
      %s52 = sphi 0, %s51
      %s66 = sphi 0, %s52
      %s70 = sphi 0, %s70
      %s72 = sphi 0, %s70
      %s73 = sphi 0, %s72
      %s87 = sphi 0, %s73
      %s93 = sphi 0, %s95
      %s96 = sphi 0, %s93
      %s97 = sphi 0, %s96
      %s113 = sphi 0, %s97
    $region4: #{tpu_custom_call.1} parent=1 // loop_header_branch
      %18 = sbr.rel (%p16) target = $region8
    $region5: #{tpu_custom_call.1} parent=1 // loop_body
      %s20 = ssub.s32 %s15, 1
      %s21 = ssub.s32 %s15, 2
      %s22 = sadd.s32 %s15, 1
      %s23 = ssub.s32 %s15, %s22
      %p24 = scmp.eq.s32.totalorder %s23, 0
      %s26 = sadd.s32 %s25, 1
      %s27 = scalar_select %p24, %s25, %s26
      %p30 = pneg %p24
      %p31 = scmp.eq.s32.totalorder %s15, 1
      %p32 = por %p30, %p31
      %p33 = scmp.ne.s32.totalorder %s25, %s28
      %p34 = scmp.eq.s32.totalorder %s15, 0
      %p35 = por %p33, %p34
      %p36 = scmp.ne.s32.totalorder %s25, %s28
      %p37 = scmp.eq.s32.totalorder %s20, 1
      %p38 = por %p36, %p37
      %p39 = scmp.ne.s32.totalorder %s28, %s29
      %p40 = scmp.eq.s32.totalorder %s20, 0
      %p41 = por %p39, %p40
      %p42 = scmp.ne.s32.totalorder %s28, %s29
      %p43 = scmp.eq.s32.totalorder %s21, 1
      %p44 = por %p42, %p43
      %p46 = scmp.ne.s32.totalorder %s29, %s45
      %p47 = scmp.eq.s32.totalorder %s21, 0
      %p48 = por %p46, %p47
      %s50 = sadd.s32 %s49, 1
      %p53 = scmp.eq.s32.totalorder %s15, 1
      %p54 = scmp.ne.s32.totalorder %s49, %s51
      %p55 = scmp.eq.s32.totalorder %s15, 0
      %p56 = por %p54, %p55
      %p57 = scmp.ne.s32.totalorder %s49, %s51
      %p58 = scmp.eq.s32.totalorder %s20, 1
      %p59 = por %p57, %p58
      %p60 = scmp.ne.s32.totalorder %s51, %s52
      %p61 = scmp.eq.s32.totalorder %s20, 0
      %p62 = por %p60, %p61
      %p63 = scmp.ne.s32.totalorder %s51, %s52
      %p64 = scmp.eq.s32.totalorder %s21, 1
      %p65 = por %p63, %p64
      %p67 = scmp.ne.s32.totalorder %s52, %s66
      %p68 = scmp.eq.s32.totalorder %s21, 0
      %p69 = por %p67, %p68
      %s71 = sadd.s32 %s70, 1
      %p74 = scmp.eq.s32.totalorder %s15, 1
      %p75 = scmp.ne.s32.totalorder %s70, %s72
      %p76 = scmp.eq.s32.totalorder %s15, 0
      %p77 = por %p75, %p76
      %p78 = scmp.ne.s32.totalorder %s70, %s72
      %p79 = scmp.eq.s32.totalorder %s20, 1
      %p80 = por %p78, %p79
      %p81 = scmp.ne.s32.totalorder %s72, %s73
      %p82 = scmp.eq.s32.totalorder %s20, 0
      %p83 = por %p81, %p82
      %p84 = scmp.ne.s32.totalorder %s72, %s73
      %p85 = scmp.eq.s32.totalorder %s21, 1
      %p86 = por %p84, %p85
      %p88 = scmp.ne.s32.totalorder %s73, %s87
      %p89 = scmp.eq.s32.totalorder %s21, 0
      %p90 = por %p88, %p89
      %s91 = ssub.s32 %s15, %s22
      %p92 = scmp.eq.s32.totalorder %s91, 0
      %s94 = sadd.s32 %s93, 1
      %s95 = scalar_select %p92, %s93, %s94
      %p98 = pneg %p92
      %p99 = scmp.eq.s32.totalorder %s15, 1
      %p100 = por %p98, %p99
      %p101 = scmp.ne.s32.totalorder %s93, %s96
      %p102 = scmp.eq.s32.totalorder %s15, 0
      %p103 = por %p101, %p102
      %p104 = scmp.ne.s32.totalorder %s93, %s96
      %p105 = scmp.eq.s32.totalorder %s20, 1
      %p106 = por %p104, %p105
      %p107 = scmp.ne.s32.totalorder %s96, %s97
      %p108 = scmp.eq.s32.totalorder %s20, 0
      %p109 = por %p107, %p108
      %p110 = scmp.ne.s32.totalorder %s96, %s97
      %p111 = scmp.eq.s32.totalorder %s21, 1
      %p112 = por %p110, %p111
      %p114 = scmp.ne.s32.totalorder %s97, %s113
      %p115 = scmp.eq.s32.totalorder %s21, 0
      %p116 = por %p114, %p115
      %p117 = scmp.le.s32.totalorder 1, %s15
      %p118 = scmp.lt.s32.totalorder %s15, 3
      %p119 = pnand %p117, %p118
      %p120 = pneg %p119
      // Predicated region
      $region9: #{tpu_custom_call.1} parent=5 // pred_check
        _
      $region10: #{tpu_custom_call.1} parent=5 // pred_check_branch
        %122 = sbr.rel (%p119) target = $region12
      $region11: #{tpu_custom_call.1} parent=5 // pred_region
        %s123 = ssub.s32 %s15, 1
        // Predicated region
        $region13: #{tpu_custom_call.1} parent=11 // pred_check
          %p124 = pneg %p62
        $region14: #{tpu_custom_call.1} parent=11 // pred_check_branch
          %126 = sbr.rel (%p124) target = $region16
        $region15: #{tpu_custom_call.1} parent=11 // pred_region
          _
        $region16: #{tpu_custom_call.1} parent=11 // pred_fallthru
          _
        // Predicated region
        $region17: #{tpu_custom_call.1} parent=11 // pred_check
          %p127 = pneg %p83
        $region18: #{tpu_custom_call.1} parent=11 // pred_check_branch
          %129 = sbr.rel (%p127) target = $region20
        $region19: #{tpu_custom_call.1} parent=11 // pred_region
          _
        $region20: #{tpu_custom_call.1} parent=11 // pred_fallthru
          _
      $region12: #{tpu_custom_call.1} parent=5 // pred_fallthru
        _
      %p130 = scmp.lt.s32.totalorder %s15, 2
      // Predicated region
      $region21: #{tpu_custom_call.1} parent=5 // pred_check
        %p131 = pneg %p130
      $region22: #{tpu_custom_call.1} parent=5 // pred_check_branch
        %133 = sbr.rel (%p131) target = $region24
      $region23: #{tpu_custom_call.1} parent=5 // pred_region
        // Predicated region
        $region25: #{tpu_custom_call.1} parent=23 // pred_check
          %p134 = pneg %p35
        $region26: #{tpu_custom_call.1} parent=23 // pred_check_branch
          %136 = sbr.rel (%p134) target = $region28
        $region27: #{tpu_custom_call.1} parent=23 // pred_region
          %s137 = sand.u32 %s25, 1
          %s138 = scalar_lea.sflag [#allocation3], %s137
          %s139 = sand.u32 %s25, 1
          %s140 = smul.addr %s139, 128
          %s141 = scalar_lea.vmem [#allocation2], %s140
          %s142 = smul.u32 8, %s15
          %s144 = ssub.s32 2048, 2048
          %145 = vsyncadd %s138, %s144
          %s146 = smul.addr %s142, 128
          %s147 = scalar_lea.hbm %s0, %s146
          %s148 = sshll.u32 %s141, 4
          %s149 = int_to_ptr.vmem [resolvable:$true] %s148
          %154 = dma.hbm_to_vmem [thread:$0]  %s147, 2048, %s149, %s138, 2048, 1024, 64
        $region28: #{tpu_custom_call.1} parent=23 // pred_fallthru
          _
      $region24: #{tpu_custom_call.1} parent=5 // pred_fallthru
        _
      %p155 = scmp.le.s32.totalorder 1, %s15
      %p156 = scmp.lt.s32.totalorder %s15, 3
      %p157 = pnand %p155, %p156
      %p158 = pneg %p157
      // Predicated region
      $region29: #{tpu_custom_call.1} parent=5 // pred_check
        _
      $region30: #{tpu_custom_call.1} parent=5 // pred_check_branch
        %160 = sbr.rel (%p157) target = $region32
      $region31: #{tpu_custom_call.1} parent=5 // pred_region
        %s161 = ssub.s32 %s15, 1
        %s162 = sand.u32 %s28, 1
        %s163 = scalar_lea.sflag [#allocation3], %s162
        %s164 = sand.u32 %s28, 1
        %s165 = smul.addr %s164, 128
        %s166 = scalar_lea.vmem [#allocation2], %s165
        // Predicated region
        $region33: #{tpu_custom_call.1} parent=31 // pred_check
          %p167 = pneg %p41
        $region34: #{tpu_custom_call.1} parent=31 // pred_check_branch
          %169 = sbr.rel (%p167) target = $region36
        $region35: #{tpu_custom_call.1} parent=31 // pred_region
          %170 = dma.done %s163, 2048
        $region36: #{tpu_custom_call.1} parent=31 // pred_fallthru
          _
        %s171 = sand.u32 %s28, 1
        %s172 = scalar_lea.sflag [#allocation3], %s171
        %s173 = sand.u32 %s28, 1
        %s174 = smul.addr %s173, 128
        %s175 = scalar_lea.vmem [#allocation2], %s174
        %p176 = pneg %p41
        %p177 = pneg %p38
        %p178 = pneg %p62
        %p179 = pneg %p59
        %p180 = pneg %p83
        %p181 = pneg %p80
        %p182 = pneg %p109
        %p183 = pneg %p106
        %s184 = sand.u32 %s96, 1
        %s185 = scalar_lea.sflag [#allocation4], %s184
        %s186 = sand.u32 %s96, 1
        %s187 = smul.addr %s186, 128
        %s188 = scalar_lea.vmem [#allocation5], %s187
        %s189 = smul.u32 8, %s20
        %s190 = smul.u32 8, %s20
        %v191 = vld [vmem:[%s166] sm:$0xff]
        %v192 = vld [vmem:[%s166 + $0x8] sm:$0xff]
        %v193 = vld [vmem:[%s166 + $0x10] sm:$0xff]
        %v194 = vld [vmem:[%s166 + $0x18] sm:$0xff]
        %v195 = vld [vmem:[%s166 + $0x20] sm:$0xff]
        %v196 = vld [vmem:[%s166 + $0x28] sm:$0xff]
        %v197 = vld [vmem:[%s166 + $0x30] sm:$0xff]
        %v198 = vld [vmem:[%s166 + $0x38] sm:$0xff]
        %v199 = vld [vmem:[%s166 + $0x40] sm:$0xf]
        %v200 = vld [vmem:[%s166 + $0x48] sm:$0xf]
        %v201 = vld [vmem:[%s166 + $0x50] sm:$0xf]
        %v202 = vld [vmem:[%s166 + $0x58] sm:$0xf]
        %v203 = vld [vmem:[%s166 + $0x60] sm:$0xf]
        %v204 = vld [vmem:[%s166 + $0x68] sm:$0xf]
        %v205 = vld [vmem:[%s166 + $0x70] sm:$0xf]
        %v206 = vld [vmem:[%s166 + $0x78] sm:$0xf]
        %v207 = vld [vmem:[%s1] sm:$0xff]
        %v208 = vld [vmem:[%s1 + $0x8] sm:$0xf]
        %v209 = vld [vmem:[%s2] sm:$0xff]
        %v210 = vld [vmem:[%s2 + $0x8] sm:$0xf]
        %vm211 = vcmask 97280
        %v213 = vsel %vm211, %v207, 0
        %v216 = vsel %vm211, %v208, 0
        %vm218 = vcmask 1043456
        %v220 = vsel %vm218, %v199, 0
        %v223 = vsel %vm218, %v200, 0
        %v226 = vsel %vm218, %v201, 0
        %v229 = vsel %vm218, %v202, 0
        %v232 = vsel %vm218, %v203, 0
        %v235 = vsel %vm218, %v204, 0
        %v238 = vsel %vm218, %v205, 0
        %v241 = vsel %vm218, %v206, 0
        %243 = vmatprep.subr.mxu0 0.0
        %244 = vmatpush1.msra.mxu0 0.0
        %245 = vmatprep.subr.mxu0 0.0
        %246 = vmatpush1.msra.mxu0 0.0
        %247 = vmatprep.subr.mxu0 0.0
        %248 = vmatpush1.msra.mxu0 0.0
        %249 = vmatprep.subr.mxu0 0.0
        %250 = vmatpush1.msra.mxu0 0.0
        %251 = vmatprep.subr.mxu0 0.0
        %252 = vmatpush1.msra.mxu0 0.0
        %253 = vmatprep.subr.mxu0 0.0
        %254 = vmatpush1.msra.mxu0 0.0
        %255 = vmatprep.subr.mxu0 0.0
        %256 = vmatpush1.msra.mxu0 0.0
        %257 = vmatprep.subr.mxu0 0.0
        %258 = vmatpush1.msra.mxu0 0.0
        %259 = vmatprep.subr.mxu0 0.0
        %260 = vmatpush1.msra.mxu0 0.0
        %261 = vmatprep.subr.mxu0 0.0
        %262 = vmatpush1.msra.mxu0 0.0
        %263 = vmatprep.subr.mxu0 0.0
        %264 = vmatpush1.msra.mxu0 0.0
        %265 = vmatprep.subr.mxu0 0.0
        %266 = vmatpush1.msra.mxu0 0.0
        %267 = vmatprep.subr.mxu0 0.0
        %268 = vmatpush1.msra.mxu0 0.0
        %269 = vmatprep.subr.mxu0 0.0
        %270 = vmatpush1.msra.mxu0 0.0
        %271 = vmatprep.subr.mxu0 %v223
        %272 = vmatpush1.msra.mxu0 %v220
        %273 = vmatprep.subr.mxu0 %v192
        %274 = vmatpush1.msra.mxu0 %v191
        %275 = vmatprep.subr.mxu0 0.0
        %276 = vmatpush2.msra.mxu0 0.0
        %277 = vmatprep.subr.mxu0 0.0
        %278 = vmatpush2.msra.mxu0 0.0
        %279 = vmatprep.subr.mxu0 0.0
        %280 = vmatpush2.msra.mxu0 0.0
        %281 = vmatprep.subr.mxu0 0.0
        %282 = vmatpush2.msra.mxu0 0.0
        %283 = vmatprep.subr.mxu0 0.0
        %284 = vmatpush2.msra.mxu0 0.0
        %285 = vmatprep.subr.mxu0 0.0
        %286 = vmatpush2.msra.mxu0 0.0
        %287 = vmatprep.subr.mxu0 0.0
        %288 = vmatpush2.msra.mxu0 0.0
        %289 = vmatprep.subr.mxu0 0.0
        %290 = vmatpush2.msra.mxu0 0.0
        %291 = vmatprep.subr.mxu0 0.0
        %292 = vmatpush2.msra.mxu0 0.0
        %293 = vmatprep.subr.mxu0 0.0
        %294 = vmatpush2.msra.mxu0 0.0
        %295 = vmatprep.subr.mxu0 0.0
        %296 = vmatpush2.msra.mxu0 0.0
        %297 = vmatprep.subr.mxu0 0.0
        %298 = vmatpush2.msra.mxu0 0.0
        %299 = vmatprep.subr.mxu0 0.0
        %300 = vmatpush2.msra.mxu0 0.0
        %301 = vmatprep.subr.mxu0 0.0
        %302 = vmatpush2.msra.mxu0 0.0
        %303 = vmatprep.subr.mxu0 0.0
        %304 = vmatpush2.msra.mxu0 0.0
        %305 = vmatprep.subr.mxu0 0.0
        %306 = vmatpush2.msra.mxu0 0.0
        %307 = vmatprep.mubr.f32.mxu0 0.0
        %308 = vmatmul.mubr.f32.gmra.mxu0 %v213
        %v309 = vpop.f32.mrf.mxu0
        %v310 = vadd.f32 0.0, %v309
        %v311 = vpop.f32.mrf.mxu0
        %v312 = vadd.f32 0.0, %v311
        %313 = vmatprep.mubr.f32.mxu0 0.0
        %314 = vmatmul.mubr.f32.gmra.mxu0 %v216
        %v315 = vpop.f32.mrf.mxu0
        %v316 = vadd.f32 0.0, %v315
        %v317 = vpop.f32.mrf.mxu0
        %v318 = vadd.f32 0.0, %v317
        %319 = vdwg.mxu0
        %320 = vmatprep.subr.mxu0 0.0
        %321 = vmatpush1.msra.mxu0 0.0
        %322 = vmatprep.subr.mxu0 0.0
        %323 = vmatpush1.msra.mxu0 0.0
        %324 = vmatprep.subr.mxu0 0.0
        %325 = vmatpush1.msra.mxu0 0.0
        %326 = vmatprep.subr.mxu0 0.0
        %327 = vmatpush1.msra.mxu0 0.0
        %328 = vmatprep.subr.mxu0 0.0
        %329 = vmatpush1.msra.mxu0 0.0
        %330 = vmatprep.subr.mxu0 0.0
        %331 = vmatpush1.msra.mxu0 0.0
        %332 = vmatprep.subr.mxu0 0.0
        %333 = vmatpush1.msra.mxu0 0.0
        %334 = vmatprep.subr.mxu0 0.0
        %335 = vmatpush1.msra.mxu0 0.0
        %336 = vmatprep.subr.mxu0 0.0
        %337 = vmatpush1.msra.mxu0 0.0
        %338 = vmatprep.subr.mxu0 0.0
        %339 = vmatpush1.msra.mxu0 0.0
        %340 = vmatprep.subr.mxu0 0.0
        %341 = vmatpush1.msra.mxu0 0.0
        %342 = vmatprep.subr.mxu0 0.0
        %343 = vmatpush1.msra.mxu0 0.0
        %344 = vmatprep.subr.mxu0 0.0
        %345 = vmatpush1.msra.mxu0 0.0
        %346 = vmatprep.subr.mxu0 0.0
        %347 = vmatpush1.msra.mxu0 0.0
        %348 = vmatprep.subr.mxu0 %v229
        %349 = vmatpush1.msra.mxu0 %v226
        %350 = vmatprep.subr.mxu0 %v194
        %351 = vmatpush1.msra.mxu0 %v193
        %352 = vmatprep.subr.mxu0 0.0
        %353 = vmatpush2.msra.mxu0 0.0
        %354 = vmatprep.subr.mxu0 0.0
        %355 = vmatpush2.msra.mxu0 0.0
        %356 = vmatprep.subr.mxu0 0.0
        %357 = vmatpush2.msra.mxu0 0.0
        %358 = vmatprep.subr.mxu0 0.0
        %359 = vmatpush2.msra.mxu0 0.0
        %360 = vmatprep.subr.mxu0 0.0
        %361 = vmatpush2.msra.mxu0 0.0
        %362 = vmatprep.subr.mxu0 0.0
        %363 = vmatpush2.msra.mxu0 0.0
        %364 = vmatprep.subr.mxu0 0.0
        %365 = vmatpush2.msra.mxu0 0.0
        %366 = vmatprep.subr.mxu0 0.0
        %367 = vmatpush2.msra.mxu0 0.0
        %368 = vmatprep.subr.mxu0 0.0
        %369 = vmatpush2.msra.mxu0 0.0
        %370 = vmatprep.subr.mxu0 0.0
        %371 = vmatpush2.msra.mxu0 0.0
        %372 = vmatprep.subr.mxu0 0.0
        %373 = vmatpush2.msra.mxu0 0.0
        %374 = vmatprep.subr.mxu0 0.0
        %375 = vmatpush2.msra.mxu0 0.0
        %376 = vmatprep.subr.mxu0 0.0
        %377 = vmatpush2.msra.mxu0 0.0
        %378 = vmatprep.subr.mxu0 0.0
        %379 = vmatpush2.msra.mxu0 0.0
        %380 = vmatprep.subr.mxu0 0.0
        %381 = vmatpush2.msra.mxu0 0.0
        %382 = vmatprep.subr.mxu0 0.0
        %383 = vmatpush2.msra.mxu0 0.0
        %384 = vmatprep.mubr.f32.mxu0 0.0
        %385 = vmatmul.mubr.f32.gmra.mxu0 %v213
        %v386 = vpop.f32.mrf.mxu0
        %v387 = vadd.f32 0.0, %v386
        %v388 = vpop.f32.mrf.mxu0
        %v389 = vadd.f32 0.0, %v388
        %390 = vmatprep.mubr.f32.mxu0 0.0
        %391 = vmatmul.mubr.f32.gmra.mxu0 %v216
        %v392 = vpop.f32.mrf.mxu0
        %v393 = vadd.f32 0.0, %v392
        %v394 = vpop.f32.mrf.mxu0
        %v395 = vadd.f32 0.0, %v394
        %396 = vdwg.mxu0
        %397 = vmatprep.subr.mxu0 0.0
        %398 = vmatpush1.msra.mxu0 0.0
        %399 = vmatprep.subr.mxu0 0.0
        %400 = vmatpush1.msra.mxu0 0.0
        %401 = vmatprep.subr.mxu0 0.0
        %402 = vmatpush1.msra.mxu0 0.0
        %403 = vmatprep.subr.mxu0 0.0
        %404 = vmatpush1.msra.mxu0 0.0
        %405 = vmatprep.subr.mxu0 0.0
        %406 = vmatpush1.msra.mxu0 0.0
        %407 = vmatprep.subr.mxu0 0.0
        %408 = vmatpush1.msra.mxu0 0.0
        %409 = vmatprep.subr.mxu0 0.0
        %410 = vmatpush1.msra.mxu0 0.0
        %411 = vmatprep.subr.mxu0 0.0
        %412 = vmatpush1.msra.mxu0 0.0
        %413 = vmatprep.subr.mxu0 0.0
        %414 = vmatpush1.msra.mxu0 0.0
        %415 = vmatprep.subr.mxu0 0.0
        %416 = vmatpush1.msra.mxu0 0.0
        %417 = vmatprep.subr.mxu0 0.0
        %418 = vmatpush1.msra.mxu0 0.0
        %419 = vmatprep.subr.mxu0 0.0
        %420 = vmatpush1.msra.mxu0 0.0
        %421 = vmatprep.subr.mxu0 0.0
        %422 = vmatpush1.msra.mxu0 0.0
        %423 = vmatprep.subr.mxu0 0.0
        %424 = vmatpush1.msra.mxu0 0.0
        %425 = vmatprep.subr.mxu0 %v235
        %426 = vmatpush1.msra.mxu0 %v232
        %427 = vmatprep.subr.mxu0 %v196
        %428 = vmatpush1.msra.mxu0 %v195
        %429 = vmatprep.subr.mxu0 0.0
        %430 = vmatpush2.msra.mxu0 0.0
        %431 = vmatprep.subr.mxu0 0.0
        %432 = vmatpush2.msra.mxu0 0.0
        %433 = vmatprep.subr.mxu0 0.0
        %434 = vmatpush2.msra.mxu0 0.0
        %435 = vmatprep.subr.mxu0 0.0
        %436 = vmatpush2.msra.mxu0 0.0
        %437 = vmatprep.subr.mxu0 0.0
        %438 = vmatpush2.msra.mxu0 0.0
        %439 = vmatprep.subr.mxu0 0.0
        %440 = vmatpush2.msra.mxu0 0.0
        %441 = vmatprep.subr.mxu0 0.0
        %442 = vmatpush2.msra.mxu0 0.0
        %443 = vmatprep.subr.mxu0 0.0
        %444 = vmatpush2.msra.mxu0 0.0
        %445 = vmatprep.subr.mxu0 0.0
        %446 = vmatpush2.msra.mxu0 0.0
        %447 = vmatprep.subr.mxu0 0.0
        %448 = vmatpush2.msra.mxu0 0.0
        %449 = vmatprep.subr.mxu0 0.0
        %450 = vmatpush2.msra.mxu0 0.0
        %451 = vmatprep.subr.mxu0 0.0
        %452 = vmatpush2.msra.mxu0 0.0
        %453 = vmatprep.subr.mxu0 0.0
        %454 = vmatpush2.msra.mxu0 0.0
        %455 = vmatprep.subr.mxu0 0.0
        %456 = vmatpush2.msra.mxu0 0.0
        %457 = vmatprep.subr.mxu0 0.0
        %458 = vmatpush2.msra.mxu0 0.0
        %459 = vmatprep.subr.mxu0 0.0
        %460 = vmatpush2.msra.mxu0 0.0
        %461 = vmatprep.mubr.f32.mxu0 0.0
        %462 = vmatmul.mubr.f32.gmra.mxu0 %v213
        %v463 = vpop.f32.mrf.mxu0
        %v464 = vadd.f32 0.0, %v463
        %v465 = vpop.f32.mrf.mxu0
        %v466 = vadd.f32 0.0, %v465
        %467 = vmatprep.mubr.f32.mxu0 0.0
        %468 = vmatmul.mubr.f32.gmra.mxu0 %v216
        %v469 = vpop.f32.mrf.mxu0
        %v470 = vadd.f32 0.0, %v469
        %v471 = vpop.f32.mrf.mxu0
        %v472 = vadd.f32 0.0, %v471
        %473 = vdwg.mxu0
        %474 = vmatprep.subr.mxu0 0.0
        %475 = vmatpush1.msra.mxu0 0.0
        %476 = vmatprep.subr.mxu0 0.0
        %477 = vmatpush1.msra.mxu0 0.0
        %478 = vmatprep.subr.mxu0 0.0
        %479 = vmatpush1.msra.mxu0 0.0
        %480 = vmatprep.subr.mxu0 0.0
        %481 = vmatpush1.msra.mxu0 0.0
        %482 = vmatprep.subr.mxu0 0.0
        %483 = vmatpush1.msra.mxu0 0.0
        %484 = vmatprep.subr.mxu0 0.0
        %485 = vmatpush1.msra.mxu0 0.0
        %486 = vmatprep.subr.mxu0 0.0
        %487 = vmatpush1.msra.mxu0 0.0
        %488 = vmatprep.subr.mxu0 0.0
        %489 = vmatpush1.msra.mxu0 0.0
        %490 = vmatprep.subr.mxu0 0.0
        %491 = vmatpush1.msra.mxu0 0.0
        %492 = vmatprep.subr.mxu0 0.0
        %493 = vmatpush1.msra.mxu0 0.0
        %494 = vmatprep.subr.mxu0 0.0
        %495 = vmatpush1.msra.mxu0 0.0
        %496 = vmatprep.subr.mxu0 0.0
        %497 = vmatpush1.msra.mxu0 0.0
        %498 = vmatprep.subr.mxu0 0.0
        %499 = vmatpush1.msra.mxu0 0.0
        %500 = vmatprep.subr.mxu0 0.0
        %501 = vmatpush1.msra.mxu0 0.0
        %502 = vmatprep.subr.mxu0 %v241
        %503 = vmatpush1.msra.mxu0 %v238
        %504 = vmatprep.subr.mxu0 %v198
        %505 = vmatpush1.msra.mxu0 %v197
        %506 = vmatprep.subr.mxu0 0.0
        %507 = vmatpush2.msra.mxu0 0.0
        %508 = vmatprep.subr.mxu0 0.0
        %509 = vmatpush2.msra.mxu0 0.0
        %510 = vmatprep.subr.mxu0 0.0
        %511 = vmatpush2.msra.mxu0 0.0
        %512 = vmatprep.subr.mxu0 0.0
        %513 = vmatpush2.msra.mxu0 0.0
        %514 = vmatprep.subr.mxu0 0.0
        %515 = vmatpush2.msra.mxu0 0.0
        %516 = vmatprep.subr.mxu0 0.0
        %517 = vmatpush2.msra.mxu0 0.0
        %518 = vmatprep.subr.mxu0 0.0
        %519 = vmatpush2.msra.mxu0 0.0
        %520 = vmatprep.subr.mxu0 0.0
        %521 = vmatpush2.msra.mxu0 0.0
        %522 = vmatprep.subr.mxu0 0.0
        %523 = vmatpush2.msra.mxu0 0.0
        %524 = vmatprep.subr.mxu0 0.0
        %525 = vmatpush2.msra.mxu0 0.0
        %526 = vmatprep.subr.mxu0 0.0
        %527 = vmatpush2.msra.mxu0 0.0
        %528 = vmatprep.subr.mxu0 0.0
        %529 = vmatpush2.msra.mxu0 0.0
        %530 = vmatprep.subr.mxu0 0.0
        %531 = vmatpush2.msra.mxu0 0.0
        %532 = vmatprep.subr.mxu0 0.0
        %533 = vmatpush2.msra.mxu0 0.0
        %534 = vmatprep.subr.mxu0 0.0
        %535 = vmatpush2.msra.mxu0 0.0
        %536 = vmatprep.subr.mxu0 0.0
        %537 = vmatpush2.msra.mxu0 0.0
        %538 = vmatprep.mubr.f32.mxu0 0.0
        %539 = vmatmul.mubr.f32.gmra.mxu0 %v213
        %v540 = vpop.f32.mrf.mxu0
        %v541 = vadd.f32 0.0, %v540
        %v542 = vpop.f32.mrf.mxu0
        %v543 = vadd.f32 0.0, %v542
        %544 = vmatprep.mubr.f32.mxu0 0.0
        %545 = vmatmul.mubr.f32.gmra.mxu0 %v216
        %v546 = vpop.f32.mrf.mxu0
        %v547 = vadd.f32 0.0, %v546
        %v548 = vpop.f32.mrf.mxu0
        %v549 = vadd.f32 0.0, %v548
        %550 = vdwg.mxu0
        %v551 = vadd.f32 %v191, %v310
        %v552 = vadd.f32 %v192, %v312
        %v553 = vadd.f32 %v193, %v387
        %v554 = vadd.f32 %v194, %v389
        %v555 = vadd.f32 %v195, %v464
        %v556 = vadd.f32 %v196, %v466
        %v557 = vadd.f32 %v197, %v541
        %v558 = vadd.f32 %v198, %v543
        %v559 = vadd.f32 %v199, %v316
        %v560 = vadd.f32 %v200, %v318
        %v561 = vadd.f32 %v201, %v393
        %v562 = vadd.f32 %v202, %v395
        %v563 = vadd.f32 %v203, %v470
        %v564 = vadd.f32 %v204, %v472
        %v565 = vadd.f32 %v205, %v547
        %v566 = vadd.f32 %v206, %v549
        %568 = vset.pattern.permute.xlu0 0
        %569 = vperm.xlu0 %568, %v209
        %v570 = vpop.permute.xlu0 %569
        %573 = vset.pattern.permute.xlu0 0
        %574 = vperm.xlu0 %573, %v210
        %v575 = vpop.permute.xlu0 %574
        %v577 = vadd.f32 %v551, %v570
        %v578 = vadd.f32 %v552, %v570
        %v579 = vadd.f32 %v553, %v570
        %v580 = vadd.f32 %v554, %v570
        %v581 = vadd.f32 %v555, %v570
        %v582 = vadd.f32 %v556, %v570
        %v583 = vadd.f32 %v557, %v570
        %v584 = vadd.f32 %v558, %v570
        %v585 = vadd.f32 %v559, %v575
        %v586 = vadd.f32 %v560, %v575
        %v587 = vadd.f32 %v561, %v575
        %v588 = vadd.f32 %v562, %v575
        %v589 = vadd.f32 %v563, %v575
        %v590 = vadd.f32 %v564, %v575
        %v591 = vadd.f32 %v565, %v575
        %v592 = vadd.f32 %v566, %v575
        %593 = vst [vmem:[%s188] sm:$0xff] %v577
        %594 = vst [vmem:[%s188 + $0x8] sm:$0xff] %v578
        %595 = vst [vmem:[%s188 + $0x10] sm:$0xff] %v579
        %596 = vst [vmem:[%s188 + $0x18] sm:$0xff] %v580
        %597 = vst [vmem:[%s188 + $0x20] sm:$0xff] %v581
        %598 = vst [vmem:[%s188 + $0x28] sm:$0xff] %v582
        %599 = vst [vmem:[%s188 + $0x30] sm:$0xff] %v583
        %600 = vst [vmem:[%s188 + $0x38] sm:$0xff] %v584
        %601 = vst [vmem:[%s188 + $0x40] sm:$0xf] %v585
        %602 = vst [vmem:[%s188 + $0x48] sm:$0xf] %v586
        %603 = vst [vmem:[%s188 + $0x50] sm:$0xf] %v587
        %604 = vst [vmem:[%s188 + $0x58] sm:$0xf] %v588
        %605 = vst [vmem:[%s188 + $0x60] sm:$0xf] %v589
        %606 = vst [vmem:[%s188 + $0x68] sm:$0xf] %v590
        %607 = vst [vmem:[%s188 + $0x70] sm:$0xf] %v591
        %608 = vst [vmem:[%s188 + $0x78] sm:$0xf] %v592
        %s609 = sand.u32 %s96, 1
        %s610 = scalar_lea.sflag [#allocation4], %s609
        %s611 = sand.u32 %s96, 1
        %s612 = smul.addr %s611, 128
        %s613 = scalar_lea.vmem [#allocation5], %s612
        // Predicated region
        $region37: #{tpu_custom_call.1} parent=31 // pred_check
          %p614 = pneg %p106
        $region38: #{tpu_custom_call.1} parent=31 // pred_check_branch
          %616 = sbr.rel (%p614) target = $region40
        $region39: #{tpu_custom_call.1} parent=31 // pred_region
          %s617 = smul.u32 8, %s20
          %s619 = ssub.s32 2048, 2048
          %620 = vsyncadd %s610, %s619
          %s621 = smul.addr %s617, 128
          %s622 = scalar_lea.hbm %s3, %s621
          %s623 = sshll.u32 %s613, 4
          %s624 = int_to_ptr.vmem [resolvable:$true] %s623
          %629 = dma.vmem_to_hbm [thread:$0]  %s624, 2048, %s622, %s610, 1024, 2048, 64
        $region40: #{tpu_custom_call.1} parent=31 // pred_fallthru
          _
      $region32: #{tpu_custom_call.1} parent=5 // pred_fallthru
        _
      %p630 = scmp.le.s32.totalorder 2, %s15
      // Predicated region
      $region41: #{tpu_custom_call.1} parent=5 // pred_check
        %p631 = pneg %p630
      $region42: #{tpu_custom_call.1} parent=5 // pred_check_branch
        %633 = sbr.rel (%p631) target = $region44
      $region43: #{tpu_custom_call.1} parent=5 // pred_region
        %s634 = ssub.s32 %s15, 2
        // Predicated region
        $region45: #{tpu_custom_call.1} parent=43 // pred_check
          %p635 = pneg %p112
        $region46: #{tpu_custom_call.1} parent=43 // pred_check_branch
          %637 = sbr.rel (%p635) target = $region48
        $region47: #{tpu_custom_call.1} parent=43 // pred_region
          %s638 = sand.u32 %s97, 1
          %s639 = scalar_lea.sflag [#allocation4], %s638
          %s640 = sand.u32 %s97, 1
          %s641 = smul.addr %s640, 128
          %s642 = scalar_lea.vmem [#allocation5], %s641
          %643 = dma.done %s639, 2048
        $region48: #{tpu_custom_call.1} parent=43 // pred_fallthru
          _
      $region44: #{tpu_custom_call.1} parent=5 // pred_fallthru
        _
    $region6: #{tpu_custom_call.1} parent=1 // loop_footer
      %s19 = sadd.s32 1, %s15
    $region7: #{tpu_custom_call.1} parent=1 // loop_footer_branch
      %14 = sbr.rel target = $region3
    $region8: #{tpu_custom_call.1} parent=1 // loop_exit
      _
    %644 = vsyncpa [#allocation3], 1
    %s645 = scalar_lea.sflag [#allocation3], 1
    %646 = vsyncpa %s645, 1
    %647 = vsyncpa [#allocation4], 1
    %s648 = scalar_lea.sflag [#allocation4], 1
    %649 = vsyncpa %s648, 1

</llo_original>
